<compile_context>
chip_gen: v5e
topology: v5e:2x2
jax: 0.10.0
libtpu: 0.0.40
codegen_flags: <defaults>
</compile_context>

<pallas_src>
import functools

import jax
import jax.numpy as jnp
from jax import lax
from jax.experimental import pallas as pl
from jax.experimental.pallas import tpu as pltpu


def _se_kernel(x_ref, w1_ref, b1_ref, w2_ref, b2_ref, o_ref, acc_ref,
               *, inv_hw, hw_total, hw_tile, needs_mask):
    hw = pl.program_id(1)

    @pl.when(hw == 0)
    def _zero():
        acc_ref[...] = jnp.zeros_like(acc_ref)

    # Streaming partial spatial sum for this HW tile (f32 accumulate).
    x = x_ref[...].astype(jnp.float32)                      # (TN, C, THW)
    if needs_mask:
        # Last HW tile may run past H*W; zero the out-of-range lanes.
        lane = lax.broadcasted_iota(jnp.int32, x.shape, x.ndim - 1)
        valid = (hw * hw_tile + lane) < hw_total
        x = jnp.where(valid, x, 0.0)
    acc_ref[...] += jnp.sum(x, axis=-1)                     # (TN, C)

    # Epilogue: run the tiny MLP + sigmoid exactly once per N tile.
    @pl.when(hw == pl.num_programs(1) - 1)
    def _finalize():
        pooled = acc_ref[...] * inv_hw                      # mean over H*W
        h = jnp.dot(pooled, w1_ref[...], preferred_element_type=jnp.float32)
        h = jnp.maximum(h + b1_ref[...], 0.0)               # ReLU activation
        h = jnp.dot(h, w2_ref[...], preferred_element_type=jnp.float32)
        h = h + b2_ref[...]
        o_ref[...] = jax.nn.sigmoid(h).astype(o_ref.dtype)


def _pick_tiles(N, C, HW, itemsize, n_tile, hw_tile):
    """Choose (n_tile, hw_tile) so each x block stays lane-dense and <= ~4 MiB."""
    budget = 4 * 1024 * 1024  # per x block; Pallas double-buffers it

    if n_tile is None:
        n_tile = 8 if (N % 8 == 0 and N >= 8) else N

    if hw_tile is None:
        if HW <= 128:
            hw_tile = HW                      # full-extent block, no mask needed
        else:
            hw_tile = 128                     # smallest lane-dense fallback
            for t in (2048, 1024, 512, 256, 128):
                if HW >= t and n_tile * C * t * itemsize <= budget:
                    hw_tile = t
                    break

    # If even the smallest lane-dense block exceeds budget, shrink the batch
    # tile instead of the (already minimal) lane dimension.
    while (n_tile > 1 and n_tile % 2 == 0
           and n_tile * C * hw_tile * itemsize > budget):
        n_tile //= 2

    return n_tile, hw_tile


def squeeze_and_excitation(x, w1, b1, w2, b2, *, n_tile=None, hw_tile=None):
    """x: (N, C, H, W); w1: (C, S); b1: (S,); w2: (S, C); b2: (C,).

    Weights are stored already transposed relative to torch.nn.Linear
    (w1 = W_squeeze.T, w2 = W_expand.T) so the kernel does plain x @ W.
    Returns (N, C, 1, 1) gate values, matching the PyTorch module's output.
    """
    N, C, H, W = x.shape
    S = w1.shape[1]
    HW = H * W
    x_flat = x.reshape(N, C, HW)
    itemsize = x_flat.dtype.itemsize

    n_tile, hw_tile = _pick_tiles(N, C, HW, itemsize, n_tile, hw_tile)
    grid = (N // n_tile, pl.cdiv(HW, hw_tile))
    needs_mask = (HW % hw_tile) != 0

    b1_2d = b1.reshape(1, S).astype(jnp.float32)
    b2_2d = b2.reshape(1, C).astype(jnp.float32)

    kernel = functools.partial(
        _se_kernel,
        inv_hw=1.0 / HW,
        hw_total=HW,
        hw_tile=hw_tile,
        needs_mask=needs_mask,
    )

    cost = pl.CostEstimate(
        flops=N * C * HW + 4 * N * C * S,
        transcendentals=N * C,
        bytes_accessed=(x_flat.size * itemsize
                        + (w1.size + b1.size + w2.size + b2.size) * 4
                        + N * C * itemsize),
    )

    out = pl.pallas_call(
        kernel,
        out_shape=jax.ShapeDtypeStruct((N, C), x.dtype),
        grid_spec=pltpu.PrefetchScalarGridSpec(
            num_scalar_prefetch=0,
            grid=grid,
            in_specs=[
                # x streamed over (n, hw) tiles.
                pl.BlockSpec((n_tile, C, hw_tile), lambda n, hw: (n, 0, hw)),
                # Weights / biases resident in VMEM across the whole grid.
                pl.BlockSpec((C, S), lambda n, hw: (0, 0)),
                pl.BlockSpec((1, S), lambda n, hw: (0, 0)),
                pl.BlockSpec((S, C), lambda n, hw: (0, 0)),
                pl.BlockSpec((1, C), lambda n, hw: (0, 0)),
            ],
            # Output block constant along the reduction axis (accumulator
            # pattern); written only in the finalize branch.
            out_specs=pl.BlockSpec((n_tile, C), lambda n, hw: (n, 0)),
            scratch_shapes=[pltpu.VMEM((n_tile, C), jnp.float32)],
        ),
        compiler_params=pltpu.CompilerParams(
            dimension_semantics=("parallel", "arbitrary")),
        cost_estimate=cost,
    )(x_flat, w1, b1_2d, w2, b2_2d)

    return out.reshape(N, C, 1, 1)


def _reference(x, w1, b1, w2, b2):
    pooled = jnp.mean(x, axis=(2, 3))
    h = jnp.maximum(pooled @ w1 + b1, 0.0)
    h = jax.nn.sigmoid(h @ w2 + b2)
    return h[:, :, None, None]


if __name__ == "__main__":
    # small deterministic setup: N=2, C=32, H=W=16, squeeze=8
    N, C, H, W, S = 2, 32, 16, 16, 8
    key = jax.random.PRNGKey(0)
    kx, k1, k2, k3, k4 = jax.random.split(key, 5)

    x = jax.random.normal(kx, (N, C, H, W), dtype=jnp.float32)
    # deterministic parameter init (shapes from nn.Linear(C, S) / nn.Linear(S, C))
    w1 = jax.random.normal(k1, (C, S), dtype=jnp.float32) * 0.1   # squeeze weight^T
    b1 = jax.random.normal(k2, (S,), dtype=jnp.float32) * 0.1     # squeeze bias
    w2 = jax.random.normal(k3, (S, C), dtype=jnp.float32) * 0.1   # expand weight^T
    b2 = jax.random.normal(k4, (C,), dtype=jnp.float32) * 0.1     # expand bias

    out = squeeze_and_excitation(x, w1, b1, w2, b2)
    out = jax.block_until_ready(out)

    ref = _reference(x, w1, b1, w2, b2)
    assert out.shape == (N, C, 1, 1)
    assert jnp.allclose(out, ref, atol=1e-5, rtol=1e-5)

    print("KERNEL_OK")
</pallas_src>

<mosaic_0001>
module attributes {stable_mosaic.version = 11 : i64} {
  func.func @_se_kernel(%arg0: i32, %arg1: i32, %arg2: memref<2x32x256xf32, #tpu.memory_space<vmem>>, %arg3: memref<32x8xf32, #tpu.memory_space<vmem>>, %arg4: memref<1x8xf32, #tpu.memory_space<vmem>>, %arg5: memref<8x32xf32, #tpu.memory_space<vmem>>, %arg6: memref<1x32xf32, #tpu.memory_space<vmem>>, %arg7: memref<2x32xf32, #tpu.memory_space<vmem>>, %arg8: memref<2x32xf32, #tpu.memory_space<vmem>>) attributes {dimension_semantics = [#tpu.dimension_semantics<parallel>, #tpu.dimension_semantics<arbitrary>], iteration_bounds = array<i64: 1, 1>, scalar_prefetch = 0 : i64, scratch_operands = 1 : i64, tpu.core_type = #tpu.core_type<tc>, window_params = [{transform_indices = @transform_0, window_bounds = array<i64: 2, 32, 256>}, {pipeline_mode = #tpu.pipeline_mode<synchronous>, transform_indices = @transform_1, window_bounds = array<i64: 32, 8>}, {pipeline_mode = #tpu.pipeline_mode<synchronous>, transform_indices = @transform_2, window_bounds = array<i64: 1, 8>}, {pipeline_mode = #tpu.pipeline_mode<synchronous>, transform_indices = @transform_3, window_bounds = array<i64: 8, 32>}, {pipeline_mode = #tpu.pipeline_mode<synchronous>, transform_indices = @transform_4, window_bounds = array<i64: 1, 32>}, {transform_indices = @transform_5, window_bounds = array<i64: 2, 32>}]} {
    %c0_i32 = arith.constant 0 : i32
    %0 = arith.cmpi eq, %arg1, %c0_i32 : i32
    %1 = arith.extui %0 : i1 to i32
    %c0_i32_0 = arith.constant 0 : i32
    %2 = arith.cmpi ne, %1, %c0_i32_0 : i32
    scf.if %2 {
      %cst_9 = arith.constant 0.000000e+00 : f32
      %11 = vector.broadcast %cst_9 : f32 to vector<2x32xf32>
      %c0_10 = arith.constant 0 : index
      %c0_11 = arith.constant 0 : index
      %12 = vector.load %arg8[%c0_10, %c0_11] : memref<2x32xf32, #tpu.memory_space<vmem>>, vector<2x32xf32>
      tpu.vector_store %arg8[%c0_10, %c0_11], %11 {strides = array<i32>} : memref<2x32xf32, #tpu.memory_space<vmem>>, vector<2x32xf32>,
    } else {
    }
    %c0 = arith.constant 0 : index
    %c0_1 = arith.constant 0 : index
    %c0_2 = arith.constant 0 : index
    %3 = vector.load %arg2[%c0, %c0_1, %c0_2] : memref<2x32x256xf32, #tpu.memory_space<vmem>>, vector<2x32x256xf32>
    %c0_3 = arith.constant 0 : index
    %c0_4 = arith.constant 0 : index
    %4 = vector.load %arg8[%c0_3, %c0_4] : memref<2x32xf32, #tpu.memory_space<vmem>>, vector<2x32xf32>
    %cst = arith.constant dense<0.000000e+00> : vector<2x32xf32>
    %5 = vector.multi_reduction <add>, %3, %cst [2] : vector<2x32x256xf32> to vector<2x32xf32>
    %6 = arith.addf %4, %5 : vector<2x32xf32>
    %c0_5 = arith.constant 0 : index
    %c0_6 = arith.constant 0 : index
    %7 = vector.load %arg8[%c0_5, %c0_6] : memref<2x32xf32, #tpu.memory_space<vmem>>, vector<2x32xf32>
    tpu.vector_store %arg8[%c0_5, %c0_6], %6 {strides = array<i32>} : memref<2x32xf32, #tpu.memory_space<vmem>>, vector<2x32xf32>,
    %c0_i32_7 = arith.constant 0 : i32
    %8 = arith.cmpi eq, %arg1, %c0_i32_7 : i32
    %9 = arith.extui %8 : i1 to i32
    %c0_i32_8 = arith.constant 0 : i32
    %10 = arith.cmpi ne, %9, %c0_i32_8 : i32
    scf.if %10 {
      %c0_9 = arith.constant 0 : index
      %c0_10 = arith.constant 0 : index
      %11 = vector.load %arg8[%c0_9, %c0_10] : memref<2x32xf32, #tpu.memory_space<vmem>>, vector<2x32xf32>
      %cst_11 = arith.constant 3.906250e-03 : f32
      %12 = vector.broadcast %cst_11 : f32 to vector<2x32xf32>
      %13 = arith.mulf %11, %12 : vector<2x32xf32>
      %c0_12 = arith.constant 0 : index
      %c0_13 = arith.constant 0 : index
      %14 = vector.load %arg3[%c0_12, %c0_13] : memref<32x8xf32, #tpu.memory_space<vmem>>, vector<32x8xf32>
      %cst_14 = arith.constant dense<0.000000e+00> : vector<2x8xf32>
      %15 = tpu.matmul %13, %14, %cst_14 {dimension_numbers = #tpu.dot_dimension_numbers<[1], [0], [0], [1], [0, 0, 1, 1], [], []>} : vector<2x32xf32>, vector<32x8xf32>, vector<2x8xf32> -> vector<2x8xf32>
      %c0_15 = arith.constant 0 : index
      %c0_16 = arith.constant 0 : index
      %16 = vector.load %arg4[%c0_15, %c0_16] : memref<1x8xf32, #tpu.memory_space<vmem>>, vector<1x8xf32>
      %17 = vector.broadcast %16 : vector<1x8xf32> to vector<2x8xf32>
      %18 = arith.addf %15, %17 : vector<2x8xf32>
      %cst_17 = arith.constant 0.000000e+00 : f32
      %19 = vector.broadcast %cst_17 : f32 to vector<2x8xf32>
      %20 = arith.maximumf %18, %19 : vector<2x8xf32>
      %c0_18 = arith.constant 0 : index
      %c0_19 = arith.constant 0 : index
      %21 = vector.load %arg5[%c0_18, %c0_19] : memref<8x32xf32, #tpu.memory_space<vmem>>, vector<8x32xf32>
      %cst_20 = arith.constant dense<0.000000e+00> : vector<2x32xf32>
      %22 = tpu.matmul %20, %21, %cst_20 {dimension_numbers = #tpu.dot_dimension_numbers<[1], [0], [0], [1], [0, 0, 1, 1], [], []>} : vector<2x8xf32>, vector<8x32xf32>, vector<2x32xf32> -> vector<2x32xf32>
      %c0_21 = arith.constant 0 : index
      %c0_22 = arith.constant 0 : index
      %23 = vector.load %arg6[%c0_21, %c0_22] : memref<1x32xf32, #tpu.memory_space<vmem>>, vector<1x32xf32>
      %24 = vector.broadcast %23 : vector<1x32xf32> to vector<2x32xf32>
      %25 = arith.addf %22, %24 : vector<2x32xf32>
      %26 = arith.negf %25 : vector<2x32xf32>
      %27 = math.exp %26 : vector<2x32xf32>
      %cst_23 = arith.constant 1.000000e+00 : f32
      %28 = vector.broadcast %cst_23 : f32 to vector<2x32xf32>
      %29 = arith.addf %28, %27 : vector<2x32xf32>
      %30 = arith.divf %28, %29 : vector<2x32xf32>
      %c0_24 = arith.constant 0 : index
      %c0_25 = arith.constant 0 : index
      %31 = vector.load %arg7[%c0_24, %c0_25] : memref<2x32xf32, #tpu.memory_space<vmem>>, vector<2x32xf32>
      tpu.vector_store %arg7[%c0_24, %c0_25], %30 {strides = array<i32>} : memref<2x32xf32, #tpu.memory_space<vmem>>, vector<2x32xf32>,
    } else {
    }
    return
  }
  func.func @transform_0(%arg0: i32, %arg1: i32) -> (i32, i32, i32) {
    %c0_i32 = arith.constant 0 : i32
    %c0_i32_0 = arith.constant 0 : i32
    return %arg0, %c0_i32, %arg1 : i32, i32, i32
  }
  func.func @transform_1(%arg0: i32, %arg1: i32) -> (i32, i32) {
    %c0_i32 = arith.constant 0 : i32
    %c0_i32_0 = arith.constant 0 : i32
    %c0_i32_1 = arith.constant 0 : i32
    return %c0_i32, %c0_i32_0 : i32, i32
  }
  func.func @transform_2(%arg0: i32, %arg1: i32) -> (i32, i32) {
    %c0_i32 = arith.constant 0 : i32
    %c0_i32_0 = arith.constant 0 : i32
    %c0_i32_1 = arith.constant 0 : i32
    return %c0_i32, %c0_i32_0 : i32, i32
  }
  func.func @transform_3(%arg0: i32, %arg1: i32) -> (i32, i32) {
    %c0_i32 = arith.constant 0 : i32
    %c0_i32_0 = arith.constant 0 : i32
    %c0_i32_1 = arith.constant 0 : i32
    return %c0_i32, %c0_i32_0 : i32, i32
  }
  func.func @transform_4(%arg0: i32, %arg1: i32) -> (i32, i32) {
    %c0_i32 = arith.constant 0 : i32
    %c0_i32_0 = arith.constant 0 : i32
    %c0_i32_1 = arith.constant 0 : i32
    return %c0_i32, %c0_i32_0 : i32, i32
  }
  func.func @transform_5(%arg0: i32, %arg1: i32) -> (i32, i32) {
    %c0_i32 = arith.constant 0 : i32
    %c0_i32_0 = arith.constant 0 : i32
    return %arg0, %c0_i32 : i32, i32
  }
}

</mosaic_0001>

<llo_original>
// kernel: tpu_custom_call.1
$region0: #{tpu_custom_call.1}
  #allocation0 [shape = 'u32[]', space=smem, size = 0x4, offset = 0x4, fixed_abs, tag = 'smem constant byte address 0x4 - core index']
  #allocation1 [shape = 'u32[72,128]{1,0:T(1,128)}', space=vmem, size = 0x9000, scoped, tag = 'internal scratch']
  #allocation2 [shape = 'f32[2,32]{1,0:T(2,128)}', space=vmem, size = 0x400, scoped, tag = 'scratch operand']
  %s0 = inlined_call_operand.hbm [shape: f32[2,32,256], index: 0, kind: input, shape index: {}]
  %s1 = inlined_call_operand.vmem [shape: f32[32,8], index: 1, kind: input, shape index: {}]
  %s2 = inlined_call_operand.vmem [shape: f32[1,8], index: 2, kind: input, shape index: {}]
  %s3 = inlined_call_operand.vmem [shape: f32[8,32], index: 3, kind: input, shape index: {}]
  %s4 = inlined_call_operand.vmem [shape: f32[1,32], index: 4, kind: input, shape index: {}]
  %s5 = inlined_call_operand.hbm [shape: f32[2,32], index: 5, kind: output, shape index: {}]
  %s6 = sld [smem:[#allocation0]]
  $region42: #{tpu_custom_call.1} parent=0
    _
  %s8 = ssub.s32 1, %s6
  %s9 = scalar_select 0, %s8, %s6
  $region1: #{tpu_custom_call.1} parent=0
    #allocation3 [shape = 'u8[65536]{0}', space=vmem, size = 0x10000, scoped, tag = 'input window, operand 0, single buffered']
    #allocation4 [shape = 's32[1]{0}', space=sflag, size = 0x4, scoped, tag = 'scoped memory for tpu_custom_call.1']
    #allocation5 [shape = 's32[1]{0}', space=sflag, size = 0x4, scoped, tag = 'scoped memory for tpu_custom_call.1']
    #allocation6 [shape = 'u8[1024]{0}', space=vmem, size = 0x400, scoped, tag = 'output window, operand 0, single buffered']
    %10 = vsyncpa [#allocation4], 0
    %11 = vsyncpa [#allocation5], 0
    // Predicated region
    $region2: #{tpu_custom_call.1} parent=1 // pred_check
      _
    $region3: #{tpu_custom_call.1} parent=1 // pred_check_branch
      %13 = sbr.rel (0) target = $region5
    $region4: #{tpu_custom_call.1} parent=1 // pred_region
      %15 = vsyncadd [#allocation4], 0
      %s16 = sshll.u32 %s0, 4
      %s17 = int_to_ptr.hbm [resolvable:$true] %s16
      %s18 = sshll.u32 [#allocation3], 4
      %s19 = int_to_ptr.vmem [resolvable:$true] %s18
      %24 = dma.hbm_to_vmem [thread:$0]  %s17, 2048, %s19, [#allocation4], 256, 256, 16
    $region5: #{tpu_custom_call.1} parent=1 // pred_fallthru
      _
    // Predicated region
    $region6: #{tpu_custom_call.1} parent=1 // pred_check
      _
    $region7: #{tpu_custom_call.1} parent=1 // pred_check_branch
      %26 = sbr.rel (0) target = $region9
    $region8: #{tpu_custom_call.1} parent=1 // pred_region
      _
    $region9: #{tpu_custom_call.1} parent=1 // pred_fallthru
      _
    // Predicated region
    $region10: #{tpu_custom_call.1} parent=1 // pred_check
      _
    $region11: #{tpu_custom_call.1} parent=1 // pred_check_branch
      %28 = sbr.rel (0) target = $region13
    $region12: #{tpu_custom_call.1} parent=1 // pred_region
      _
    $region13: #{tpu_custom_call.1} parent=1 // pred_fallthru
      _
    // Predicated region
    $region14: #{tpu_custom_call.1} parent=1 // pred_check
      _
    $region15: #{tpu_custom_call.1} parent=1 // pred_check_branch
      %30 = sbr.rel (0) target = $region17
    $region16: #{tpu_custom_call.1} parent=1 // pred_region
      _
    $region17: #{tpu_custom_call.1} parent=1 // pred_fallthru
      _
    // Predicated region
    $region18: #{tpu_custom_call.1} parent=1 // pred_check
      _
    $region19: #{tpu_custom_call.1} parent=1 // pred_check_branch
      %32 = sbr.rel (0) target = $region21
    $region20: #{tpu_custom_call.1} parent=1 // pred_region
      _
    $region21: #{tpu_custom_call.1} parent=1 // pred_fallthru
      _
    // Predicated region
    $region22: #{tpu_custom_call.1} parent=1 // pred_check
      _
    $region23: #{tpu_custom_call.1} parent=1 // pred_check_branch
      %34 = sbr.rel (0) target = $region25
    $region24: #{tpu_custom_call.1} parent=1 // pred_region
      %36 = dma.done [#allocation4], 2048
    $region25: #{tpu_custom_call.1} parent=1 // pred_fallthru
      _
    %p37 = scmp.eq.s32.totalorder 0, 0
    // Predicated region
    $region26: #{tpu_custom_call.1} parent=1 // pred_check
      %p38 = pneg %p37
    $region27: #{tpu_custom_call.1} parent=1 // pred_check_branch
      %40 = sbr.rel (%p38) target = $region29
    $region28: #{tpu_custom_call.1} parent=1 // pred_region
      %vm41 = vcmask 254976
      %42 = vst.msk [vmem:[#allocation2] sm:$0x3] %vm41, 0.0
    $region29: #{tpu_custom_call.1} parent=1 // pred_fallthru
      _
    %v43 = vld [vmem:[#allocation3] sm:$0xff]
    %v44 = vld [vmem:[#allocation3 + $0x8] sm:$0xff]
    %v45 = vld [vmem:[#allocation3 + $0x10] sm:$0xff]
    %v46 = vld [vmem:[#allocation3 + $0x18] sm:$0xff]
    %v47 = vld [vmem:[#allocation3 + $0x20] sm:$0xff]
    %v48 = vld [vmem:[#allocation3 + $0x28] sm:$0xff]
    %v49 = vld [vmem:[#allocation3 + $0x30] sm:$0xff]
    %v50 = vld [vmem:[#allocation3 + $0x38] sm:$0xff]
    %v51 = vld [vmem:[#allocation3 + $0x40] sm:$0xff]
    %v52 = vld [vmem:[#allocation3 + $0x48] sm:$0xff]
    %v53 = vld [vmem:[#allocation3 + $0x50] sm:$0xff]
    %v54 = vld [vmem:[#allocation3 + $0x58] sm:$0xff]
    %v55 = vld [vmem:[#allocation3 + $0x60] sm:$0xff]
    %v56 = vld [vmem:[#allocation3 + $0x68] sm:$0xff]
    %v57 = vld [vmem:[#allocation3 + $0x70] sm:$0xff]
    %v58 = vld [vmem:[#allocation3 + $0x78] sm:$0xff]
    %v59 = vld [vmem:[#allocation2] sm:$0x3]
    %v60 = vadd.f32 %v43, %v44
    %61 = vadd.xlane.f32.xlu0 %v60
    %v62 = vpop.xlane.xlu0 %61
    %v63 = vadd.f32 %v45, %v46
    %64 = vadd.xlane.f32.xlu0 %v63
    %v65 = vpop.xlane.xlu0 %64
    %v66 = vadd.f32 %v47, %v48
    %67 = vadd.xlane.f32.xlu0 %v66
    %v68 = vpop.xlane.xlu0 %67
    %v69 = vadd.f32 %v49, %v50
    %70 = vadd.xlane.f32.xlu0 %v69
    %v71 = vpop.xlane.xlu0 %70
    %v72 = vadd.f32 %v51, %v52
    %73 = vadd.xlane.f32.xlu0 %v72
    %v74 = vpop.xlane.xlu0 %73
    %v75 = vadd.f32 %v53, %v54
    %76 = vadd.xlane.f32.xlu0 %v75
    %v77 = vpop.xlane.xlu0 %76
    %v78 = vadd.f32 %v55, %v56
    %79 = vadd.xlane.f32.xlu0 %v78
    %v80 = vpop.xlane.xlu0 %79
    %v81 = vadd.f32 %v57, %v58
    %82 = vadd.xlane.f32.xlu0 %v81
    %v83 = vpop.xlane.xlu0 %82
    %v92 = vlaneseq
    %v93 = vand.u32 %v92, 127
    %v94 = vperm.slane %v62, %v93
    %v95 = vadd.s32 %v93, 4294967288
    %v96 = vperm.slane %v65, %v95
    %vm97 = vcmask 130112
    %v98 = vsel %vm97, %v96, %v94
    %v99 = vadd.s32 %v93, 4294967280
    %v100 = vperm.slane %v68, %v99
    %vm101 = vcmask 195712
    %v102 = vsel %vm101, %v100, %v98
    %v103 = vadd.s32 %v93, 4294967272
    %v104 = vperm.slane %v71, %v103
    %vm105 = vcmask 261312
    %v106 = vsel %vm105, %v104, %v102
    %v107 = vperm.slane %v74, %v93
    %v108 = vperm.slane %v77, %v95
    %v109 = vsel %vm97, %v108, %v107
    %v110 = vperm.slane %v80, %v99
    %v111 = vsel %vm101, %v110, %v109
    %v112 = vperm.slane %v83, %v103
    %v113 = vsel %vm105, %v112, %v111
    %vm114 = vcmask 1041409
    %v115 = vsel %vm114, %v113, %v106
    %v117 = vadd.f32 %v59, %v115
    %vm118 = vcmask 254976
    %119 = vst.msk [vmem:[#allocation2] sm:$0x3] %vm118, %v117
    // Predicated region
    $region30: #{tpu_custom_call.1} parent=1 // pred_check
      %p120 = pneg %p37
    $region31: #{tpu_custom_call.1} parent=1 // pred_check_branch
      %122 = sbr.rel (%p120) target = $region33
    $region32: #{tpu_custom_call.1} parent=1 // pred_region
      %v123 = vld [vmem:[#allocation2] sm:$0x3]
      %v124 = vmul.f32 %v123, 0.00390625
      %v125 = vld [vmem:[%s1] sm:$0xff]
      %v126 = vld [vmem:[%s1 + $0x8] sm:$0xff]
      %v127 = vld [vmem:[%s1 + $0x10] sm:$0xff]
      %v128 = vld [vmem:[%s1 + $0x18] sm:$0xff]
      %v129 = vld [vmem:[%s2] sm:$0x1]
      %v131 = vperm.slane %v129, 0
      %vm133 = vcmask 261120
      %v135 = vsel %vm133, %v124, 0
      %137 = vmatpush.msra.mxu0 0.0
      %138 = vmatpush.msra.mxu0 0.0
      %139 = vmatpush.msra.mxu0 0.0
      %140 = vmatpush.msra.mxu0 0.0
      %141 = vmatpush.msra.mxu0 0.0
      %142 = vmatpush.msra.mxu0 0.0
      %143 = vmatpush.msra.mxu0 0.0
      %144 = vmatpush.msra.mxu0 0.0
      %145 = vmatpush.msra.mxu0 0.0
      %146 = vmatpush.msra.mxu0 0.0
      %147 = vmatpush.msra.mxu0 0.0
      %148 = vmatpush.msra.mxu0 0.0
      %149 = vmatpush.msra.mxu0 %v128
      %150 = vmatpush.msra.mxu0 %v127
      %151 = vmatpush.msra.mxu0 %v126
      %152 = vmatpush.msra.mxu0 %v125
      %153 = vmatmul.f32.gmra.mxu0 %v135
      %v154 = vpop.f32.mrf.mxu0
      %v155 = vadd.f32 %v131, %v154
      %156 = vdwg.mxu0
      %v157 = vmax.f32 %v155, 0.0
      %v158 = vld [vmem:[%s3] sm:$0xff]
      %v159 = vld [vmem:[%s4] sm:$0x1]
      %v161 = vperm.slane %v159, 0
      %vm163 = vcmask 64512
      %v165 = vsel %vm163, %v157, 0
      %167 = vmatpush.msra.mxu0 0.0
      %168 = vmatpush.msra.mxu0 0.0
      %169 = vmatpush.msra.mxu0 0.0
      %170 = vmatpush.msra.mxu0 0.0
      %171 = vmatpush.msra.mxu0 0.0
      %172 = vmatpush.msra.mxu0 0.0
      %173 = vmatpush.msra.mxu0 0.0
      %174 = vmatpush.msra.mxu0 0.0
      %175 = vmatpush.msra.mxu0 0.0
      %176 = vmatpush.msra.mxu0 0.0
      %177 = vmatpush.msra.mxu0 0.0
      %178 = vmatpush.msra.mxu0 0.0
      %179 = vmatpush.msra.mxu0 0.0
      %180 = vmatpush.msra.mxu0 0.0
      %181 = vmatpush.msra.mxu0 0.0
      %182 = vmatpush.msra.mxu0 %v158
      %183 = vmatmul.f32.gmra.mxu0 %v165
      %v184 = vpop.f32.mrf.mxu0
      %v185 = vadd.f32 %v161, %v184
      %186 = vdwg.mxu0
      %v187 = vxor.u32 %v185, 2147483648
      %v188 = vmul.f32 %v187, 1.442695
      %v189 = vpow.pop %v188
      %v190 = vadd.f32 %v189, 1.0
      %v191 = vrcp.pop %v190
      %v192 = vmul.f32 %v190, %v191
      %v193 = vsub.f32 1.0, %v192
      %v194 = vmul.f32 %v191, %v193
      %v195 = vadd.f32 %v191, %v194
      %vm196 = vweird.f32 %v190
      %vm197 = vweird.f32 %v191
      %vm198 = vmor %vm196, %vm197
      %v199 = vsel %vm198, %v191, %v195
      %v200 = vand.u32 2147483647, %v190
      %vm201 = vcmp.eq.f32.partialorder %v200, 8.507059e+37
      %v202 = vand.u32 %v190, 2147483648
      %v203 = vor.u32 1.1754944e-38, %v202
      %v204 = vsel %vm201, %v203, %v199
      %v205 = vmul.f32 1.0, %v204
      %206 = vst.msk [vmem:[#allocation6] sm:$0x3] %vm118, %v205
    $region33: #{tpu_custom_call.1} parent=1 // pred_fallthru
      _
    // Predicated region
    $region34: #{tpu_custom_call.1} parent=1 // pred_check
      _
    $region35: #{tpu_custom_call.1} parent=1 // pred_check_branch
      %208 = sbr.rel (0) target = $region37
    $region36: #{tpu_custom_call.1} parent=1 // pred_region
      %210 = vsyncadd [#allocation5], 0
      %s212 = sshll.u32 [#allocation6], 4
      %s213 = int_to_ptr.vmem [resolvable:$true] %s212
      %s214 = sshll.u32 %s5, 4
      %s215 = int_to_ptr.hbm [resolvable:$true] %s214
      %217 = dma.vmem_to_hbm [thread:$0]  %s213, 32, %s215, [#allocation5]
    $region37: #{tpu_custom_call.1} parent=1 // pred_fallthru
      _
    // Predicated region
    $region38: #{tpu_custom_call.1} parent=1 // pred_check
      _
    $region39: #{tpu_custom_call.1} parent=1 // pred_check_branch
      %219 = sbr.rel (0) target = $region41
    $region40: #{tpu_custom_call.1} parent=1 // pred_region
      %221 = dma.done [#allocation5], 32
    $region41: #{tpu_custom_call.1} parent=1 // pred_fallthru
      _
    %222 = vsyncpa [#allocation4], 1
    %223 = vsyncpa [#allocation5], 1

</llo_original>
